<compile_context>
chip_gen: v6e
topology: v6e:2x2x1
jax: 0.10.0
libtpu: 0.0.40
codegen_flags: <defaults>
</compile_context>

<pallas_src>
import jax
import jax.numpy as jnp
from jax.experimental import pallas as pl
from jax.experimental.pallas import tpu as pltpu

# ----- "Settings" (small, deterministic, consistent with the module) -----
VOCAB_SIZE = 50
EMBED_DIM = 32
NUM_FILTERS = 8
FILTER_SIZES = (2, 3, 4)
CLASS_NUM = 4
SEQ_LEN = 16
BATCH = 2
PAD_IDX = 1
N_TAPS = sum(FILTER_SIZES)                   # 9
FEAT_DIM = NUM_FILTERS * len(FILTER_SIZES)   # 24
BL = BATCH * SEQ_LEN                         # 32


def textcnn_kernel(tok_ref, table_ref, wconv_ref, bconv_ref, fcw_ref, fcb_ref, out_ref):
    # ---- fused embedding lookup: one-hot @ table on the MXU ------------------------------
    tok = tok_ref[...]                                                   # (BL, 1) int32
    iota = jax.lax.broadcasted_iota(jnp.int32, (BL, VOCAB_SIZE), 1)
    onehot = (iota == tok).astype(jnp.float32)                           # (BL, V)
    emb = jnp.dot(onehot, table_ref[...],
                  preferred_element_type=jnp.float32)                    # (BL, E)

    # ---- all conv taps in ONE matmul: (BL, E) @ (E, N_TAPS*NF) ---------------------------
    y = jnp.dot(emb, wconv_ref[...], preferred_element_type=jnp.float32)  # (BL, 9*NF)
    y = y.reshape(BATCH, SEQ_LEN, N_TAPS * NUM_FILTERS)                   # (B, L, 72)

    # ---- per filter: shifted tap adds + bias + relu + time max-pool ----------------------
    # then accumulate straight into the logits (no lane-sparse concat).
    # Start logits from the fc bias (saves a separate trailing add).
    logits = jnp.broadcast_to(fcb_ref[...], (BATCH, CLASS_NUM)).astype(jnp.float32)
    tap = 0
    for i, k in enumerate(FILTER_SIZES):
        l_out = SEQ_LEN - k + 1
        acc = jnp.zeros((BATCH, l_out, NUM_FILTERS), jnp.float32)
        for dk in range(k):
            c0 = (tap + dk) * NUM_FILTERS
            acc = acc + y[:, dk:dk + l_out, c0:c0 + NUM_FILTERS]
        tap += k
        b_i = bconv_ref[:, i * NUM_FILTERS:(i + 1) * NUM_FILTERS]        # (1, NF)
        acc = jnp.maximum(acc + b_i[None, :, :], 0.0)                    # conv bias + relu
        pooled = jnp.max(acc, axis=1)                                    # max_pool1d over time -> (B, NF)
        logits = logits + jnp.dot(
            pooled, fcw_ref[i * NUM_FILTERS:(i + 1) * NUM_FILTERS, :],
            preferred_element_type=jnp.float32)

    # Dropout is identity at inference (eval mode).

    # ---- softmax over dim=1 ---------------------------------------------------------------
    m = jnp.max(logits, axis=1, keepdims=True)
    e = jnp.exp(logits - m)
    denom = jnp.sum(e, axis=1, keepdims=True)
    out_ref[...] = (e * pl.reciprocal(denom, approx=True)).astype(out_ref.dtype)


def textcnn_forward(tokens, emb_table, conv_ws, conv_bs, fc_w, fc_b):
    """tokens: (B, L) int32; emb_table: (V, E) f32; conv_ws[i]: (k_i, E, NF);
    conv_bs[i]: (1, NF); fc_w: (FEAT_DIM, CLASS_NUM); fc_b: (1, CLASS_NUM)."""
    tok2d = tokens.reshape(BL, 1).astype(jnp.int32)

    # Fuse all conv weights into a single (E, sum(k)*NF) matrix; tap ordering:
    # filters in FILTER_SIZES order, taps dk=0..k-1 within each filter (matches the kernel).
    w_all = jnp.concatenate(
        [w[dk] for (k, w) in zip(FILTER_SIZES, conv_ws) for dk in range(k)], axis=1)
    b_all = jnp.concatenate([b.reshape(1, NUM_FILTERS) for b in conv_bs], axis=1)  # (1, 3*NF)

    vmem = pl.BlockSpec(memory_space=pltpu.MemorySpace.VMEM)
    return pl.pallas_call(
        textcnn_kernel,
        out_shape=jax.ShapeDtypeStruct((BATCH, CLASS_NUM), jnp.float32),
        # No grid: single invocation, all operands whole-array resident in VMEM.
        in_specs=[vmem, vmem, vmem, vmem, vmem, vmem],
        out_specs=vmem,
    )(tok2d, emb_table, w_all, b_all, fc_w, fc_b)


def reference_forward(tokens, emb_table, conv_ws, conv_bs, fc_w, fc_b):
    """Pure-JAX reference (same math as the PyTorch module in eval mode)."""
    emb = emb_table[tokens]                                              # (B, L, E)
    feats = []
    for k, w, b in zip(FILTER_SIZES, conv_ws, conv_bs):
        l_out = SEQ_LEN - k + 1
        acc = jnp.zeros((BATCH, l_out, NUM_FILTERS), jnp.float32)
        for dk in range(k):
            acc = acc + jnp.einsum("ble,en->bln", emb[:, dk:dk + l_out, :], w[dk])
        acc = jnp.maximum(acc + b.reshape(1, 1, NUM_FILTERS), 0.0)
        feats.append(jnp.max(acc, axis=1))
    feat = jnp.concatenate(feats, axis=1)
    logits = feat @ fc_w + fc_b
    return jax.nn.softmax(logits, axis=1)


if __name__ == "__main__":
    key = jax.random.PRNGKey(0)
    k_tok, k_emb, k_fc_w, k_fc_b, *k_convs = jax.random.split(key, 4 + 2 * len(FILTER_SIZES))

    # Token ids (B, L)
    tokens = jax.random.randint(k_tok, (BATCH, SEQ_LEN), 0, VOCAB_SIZE, dtype=jnp.int32)

    # Embedding table ~ N(0,1), padding_idx=1 row zeroed (nn.Embedding semantics).
    emb_table = jax.random.normal(k_emb, (VOCAB_SIZE, EMBED_DIM), dtype=jnp.float32)
    emb_table = emb_table.at[PAD_IDX].set(0.0)

    # Conv weights/biases, stored as (k, E, NF) / (1, NF).
    conv_ws, conv_bs = [], []
    for i, k in enumerate(FILTER_SIZES):
        scale = 1.0 / jnp.sqrt(jnp.float32(k * EMBED_DIM))
        conv_ws.append(jax.random.uniform(k_convs[2 * i], (k, EMBED_DIM, NUM_FILTERS),
                                          jnp.float32, -scale, scale))
        conv_bs.append(jax.random.uniform(k_convs[2 * i + 1], (1, NUM_FILTERS),
                                          jnp.float32, -scale, scale))

    fc_scale = 1.0 / jnp.sqrt(jnp.float32(FEAT_DIM))
    fc_w = jax.random.uniform(k_fc_w, (FEAT_DIM, CLASS_NUM), jnp.float32, -fc_scale, fc_scale)
    fc_b = jax.random.uniform(k_fc_b, (1, CLASS_NUM), jnp.float32, -fc_scale, fc_scale)

    out = textcnn_forward(tokens, emb_table, conv_ws, conv_bs, fc_w, fc_b)
    out = jax.block_until_ready(out)

    ref = reference_forward(tokens, emb_table, conv_ws, conv_bs, fc_w, fc_b)
    assert out.shape == (BATCH, CLASS_NUM)
    # Slightly looser tolerance because the kernel uses the EUP approximate reciprocal
    # for the softmax denominator.
    assert jnp.allclose(out, ref, rtol=2e-3, atol=2e-3)

    print("KERNEL_OK")
</pallas_src>

<mosaic_0001>
module attributes {stable_mosaic.version = 11 : i64} {
  func.func @textcnn_kernel(%arg0: memref<32x1xi32, #tpu.memory_space<vmem>>, %arg1: memref<50x32xf32, #tpu.memory_space<vmem>>, %arg2: memref<32x72xf32, #tpu.memory_space<vmem>>, %arg3: memref<1x24xf32, #tpu.memory_space<vmem>>, %arg4: memref<24x4xf32, #tpu.memory_space<vmem>>, %arg5: memref<1x4xf32, #tpu.memory_space<vmem>>, %arg6: memref<2x4xf32, #tpu.memory_space<vmem>>) attributes {dimension_semantics = [], scalar_prefetch = 0 : i64, scratch_operands = 0 : i64, tpu.core_type = #tpu.core_type<tc>} {
    %c0 = arith.constant 0 : index
    %c0_0 = arith.constant 0 : index
    %0 = vector.load %arg0[%c0, %c0_0] : memref<32x1xi32, #tpu.memory_space<vmem>>, vector<32x1xi32>
    %1 = tpu.iota {dimensions = array<i32: 1>} : vector<32x50xi32>
    %2 = vector.broadcast %0 : vector<32x1xi32> to vector<32x50xi32>
    %3 = arith.cmpi eq, %1, %2 : vector<32x50xi32>
    %4 = arith.extui %3 : vector<32x50xi1> to vector<32x50xi32>
    %5 = arith.sitofp %4 : vector<32x50xi32> to vector<32x50xf32>
    %c0_1 = arith.constant 0 : index
    %c0_2 = arith.constant 0 : index
    %6 = vector.load %arg1[%c0_1, %c0_2] : memref<50x32xf32, #tpu.memory_space<vmem>>, vector<50x32xf32>
    %cst = arith.constant dense<0.000000e+00> : vector<32x32xf32>
    %7 = tpu.matmul %5, %6, %cst {dimension_numbers = #tpu.dot_dimension_numbers<[1], [0], [0], [1], [0, 0, 1, 1], [], []>} : vector<32x50xf32>, vector<50x32xf32>, vector<32x32xf32> -> vector<32x32xf32>
    %c0_3 = arith.constant 0 : index
    %c0_4 = arith.constant 0 : index
    %8 = vector.load %arg2[%c0_3, %c0_4] : memref<32x72xf32, #tpu.memory_space<vmem>>, vector<32x72xf32>
    %cst_5 = arith.constant dense<0.000000e+00> : vector<32x72xf32>
    %9 = tpu.matmul %7, %8, %cst_5 {dimension_numbers = #tpu.dot_dimension_numbers<[1], [0], [0], [1], [0, 0, 1, 1], [], []>} : vector<32x32xf32>, vector<32x72xf32>, vector<32x72xf32> -> vector<32x72xf32>
    %10 = vector.shape_cast %9 : vector<32x72xf32> to vector<2x16x72xf32>
    %c0_6 = arith.constant 0 : index
    %c0_7 = arith.constant 0 : index
    %11 = vector.load %arg5[%c0_6, %c0_7] : memref<1x4xf32, #tpu.memory_space<vmem>>, vector<1x4xf32>
    %12 = vector.shape_cast %11 : vector<1x4xf32> to vector<1x4xf32>
    %13 = vector.broadcast %12 : vector<1x4xf32> to vector<2x4xf32>
    %cst_8 = arith.constant 0.000000e+00 : f32
    %14 = vector.broadcast %cst_8 : f32 to vector<2x15x8xf32>
    %15 = vector.extract_strided_slice %10 {offsets = [0, 0, 0], sizes = [2, 15, 8], strides = [1, 1, 1]} : vector<2x16x72xf32> to vector<2x15x8xf32>
    %16 = arith.addf %14, %15 : vector<2x15x8xf32>
    %17 = vector.extract_strided_slice %10 {offsets = [0, 1, 8], sizes = [2, 15, 8], strides = [1, 1, 1]} : vector<2x16x72xf32> to vector<2x15x8xf32>
    %18 = arith.addf %16, %17 : vector<2x15x8xf32>
    %c0_9 = arith.constant 0 : index
    %c0_10 = arith.constant 0 : index
    %19 = vector.load %arg3[%c0_9, %c0_10] : memref<1x24xf32, #tpu.memory_space<vmem>>, vector<1x8xf32>
    %20 = vector.shape_cast %19 : vector<1x8xf32> to vector<1x1x8xf32>
    %21 = vector.broadcast %20 : vector<1x1x8xf32> to vector<2x15x8xf32>
    %22 = arith.addf %18, %21 : vector<2x15x8xf32>
    %cst_11 = arith.constant 0.000000e+00 : f32
    %23 = vector.broadcast %cst_11 : f32 to vector<2x15x8xf32>
    %24 = arith.maximumf %22, %23 : vector<2x15x8xf32>
    %cst_12 = arith.constant dense<0xFF800000> : vector<2x8xf32>
    %25 = vector.multi_reduction <maximumf>, %24, %cst_12 [1] : vector<2x15x8xf32> to vector<2x8xf32>
    %c0_13 = arith.constant 0 : index
    %c0_14 = arith.constant 0 : index
    %26 = vector.load %arg4[%c0_13, %c0_14] : memref<24x4xf32, #tpu.memory_space<vmem>>, vector<8x4xf32>
    %cst_15 = arith.constant dense<0.000000e+00> : vector<2x4xf32>
    %27 = tpu.matmul %25, %26, %cst_15 {dimension_numbers = #tpu.dot_dimension_numbers<[1], [0], [0], [1], [0, 0, 1, 1], [], []>} : vector<2x8xf32>, vector<8x4xf32>, vector<2x4xf32> -> vector<2x4xf32>
    %28 = arith.addf %13, %27 : vector<2x4xf32>
    %cst_16 = arith.constant 0.000000e+00 : f32
    %29 = vector.broadcast %cst_16 : f32 to vector<2x14x8xf32>
    %30 = vector.extract_strided_slice %10 {offsets = [0, 0, 16], sizes = [2, 14, 8], strides = [1, 1, 1]} : vector<2x16x72xf32> to vector<2x14x8xf32>
    %31 = arith.addf %29, %30 : vector<2x14x8xf32>
    %32 = vector.extract_strided_slice %10 {offsets = [0, 1, 24], sizes = [2, 14, 8], strides = [1, 1, 1]} : vector<2x16x72xf32> to vector<2x14x8xf32>
    %33 = arith.addf %31, %32 : vector<2x14x8xf32>
    %34 = vector.extract_strided_slice %10 {offsets = [0, 2, 32], sizes = [2, 14, 8], strides = [1, 1, 1]} : vector<2x16x72xf32> to vector<2x14x8xf32>
    %35 = arith.addf %33, %34 : vector<2x14x8xf32>
    %c0_17 = arith.constant 0 : index
    %c8 = arith.constant 8 : index
    %36 = vector.load %arg3[%c0_17, %c8] : memref<1x24xf32, #tpu.memory_space<vmem>>, vector<1x8xf32>
    %37 = vector.shape_cast %36 : vector<1x8xf32> to vector<1x1x8xf32>
    %38 = vector.broadcast %37 : vector<1x1x8xf32> to vector<2x14x8xf32>
    %39 = arith.addf %35, %38 : vector<2x14x8xf32>
    %cst_18 = arith.constant 0.000000e+00 : f32
    %40 = vector.broadcast %cst_18 : f32 to vector<2x14x8xf32>
    %41 = arith.maximumf %39, %40 : vector<2x14x8xf32>
    %cst_19 = arith.constant dense<0xFF800000> : vector<2x8xf32>
    %42 = vector.multi_reduction <maximumf>, %41, %cst_19 [1] : vector<2x14x8xf32> to vector<2x8xf32>
    %c8_20 = arith.constant 8 : index
    %c0_21 = arith.constant 0 : index
    %43 = vector.load %arg4[%c8_20, %c0_21] : memref<24x4xf32, #tpu.memory_space<vmem>>, vector<8x4xf32>
    %cst_22 = arith.constant dense<0.000000e+00> : vector<2x4xf32>
    %44 = tpu.matmul %42, %43, %cst_22 {dimension_numbers = #tpu.dot_dimension_numbers<[1], [0], [0], [1], [0, 0, 1, 1], [], []>} : vector<2x8xf32>, vector<8x4xf32>, vector<2x4xf32> -> vector<2x4xf32>
    %45 = arith.addf %28, %44 : vector<2x4xf32>
    %cst_23 = arith.constant 0.000000e+00 : f32
    %46 = vector.broadcast %cst_23 : f32 to vector<2x13x8xf32>
    %47 = vector.extract_strided_slice %10 {offsets = [0, 0, 40], sizes = [2, 13, 8], strides = [1, 1, 1]} : vector<2x16x72xf32> to vector<2x13x8xf32>
    %48 = arith.addf %46, %47 : vector<2x13x8xf32>
    %49 = vector.extract_strided_slice %10 {offsets = [0, 1, 48], sizes = [2, 13, 8], strides = [1, 1, 1]} : vector<2x16x72xf32> to vector<2x13x8xf32>
    %50 = arith.addf %48, %49 : vector<2x13x8xf32>
    %51 = vector.extract_strided_slice %10 {offsets = [0, 2, 56], sizes = [2, 13, 8], strides = [1, 1, 1]} : vector<2x16x72xf32> to vector<2x13x8xf32>
    %52 = arith.addf %50, %51 : vector<2x13x8xf32>
    %53 = vector.extract_strided_slice %10 {offsets = [0, 3, 64], sizes = [2, 13, 8], strides = [1, 1, 1]} : vector<2x16x72xf32> to vector<2x13x8xf32>
    %54 = arith.addf %52, %53 : vector<2x13x8xf32>
    %c0_24 = arith.constant 0 : index
    %c16 = arith.constant 16 : index
    %55 = vector.load %arg3[%c0_24, %c16] : memref<1x24xf32, #tpu.memory_space<vmem>>, vector<1x8xf32>
    %56 = vector.shape_cast %55 : vector<1x8xf32> to vector<1x1x8xf32>
    %57 = vector.broadcast %56 : vector<1x1x8xf32> to vector<2x13x8xf32>
    %58 = arith.addf %54, %57 : vector<2x13x8xf32>
    %cst_25 = arith.constant 0.000000e+00 : f32
    %59 = vector.broadcast %cst_25 : f32 to vector<2x13x8xf32>
    %60 = arith.maximumf %58, %59 : vector<2x13x8xf32>
    %cst_26 = arith.constant dense<0xFF800000> : vector<2x8xf32>
    %61 = vector.multi_reduction <maximumf>, %60, %cst_26 [1] : vector<2x13x8xf32> to vector<2x8xf32>
    %c16_27 = arith.constant 16 : index
    %c0_28 = arith.constant 0 : index
    %62 = vector.load %arg4[%c16_27, %c0_28] : memref<24x4xf32, #tpu.memory_space<vmem>>, vector<8x4xf32>
    %cst_29 = arith.constant dense<0.000000e+00> : vector<2x4xf32>
    %63 = tpu.matmul %61, %62, %cst_29 {dimension_numbers = #tpu.dot_dimension_numbers<[1], [0], [0], [1], [0, 0, 1, 1], [], []>} : vector<2x8xf32>, vector<8x4xf32>, vector<2x4xf32> -> vector<2x4xf32>
    %64 = arith.addf %45, %63 : vector<2x4xf32>
    %cst_30 = arith.constant dense<0xFF800000> : vector<2xf32>
    %65 = vector.multi_reduction <maximumf>, %64, %cst_30 [1] : vector<2x4xf32> to vector<2xf32>
    %66 = vector.shape_cast %65 : vector<2xf32> to vector<2x1xf32>
    %67 = vector.broadcast %66 : vector<2x1xf32> to vector<2x4xf32>
    %68 = arith.subf %64, %67 : vector<2x4xf32>
    %69 = math.exp %68 : vector<2x4xf32>
    %cst_31 = arith.constant dense<0.000000e+00> : vector<2xf32>
    %70 = vector.multi_reduction <add>, %69, %cst_31 [1] : vector<2x4xf32> to vector<2xf32>
    %71 = vector.shape_cast %70 : vector<2xf32> to vector<2x1xf32>
    %72 = tpu.reciprocal %71 {approx = true} : vector<2x1xf32> -> vector<2x1xf32>
    %73 = vector.broadcast %72 : vector<2x1xf32> to vector<2x4xf32>
    %74 = arith.mulf %69, %73 : vector<2x4xf32>
    %c0_32 = arith.constant 0 : index
    %c0_33 = arith.constant 0 : index
    %75 = vector.load %arg6[%c0_32, %c0_33] : memref<2x4xf32, #tpu.memory_space<vmem>>, vector<2x4xf32>
    tpu.vector_store %arg6[%c0_32, %c0_33], %74 {strides = array<i32>} : memref<2x4xf32, #tpu.memory_space<vmem>>, vector<2x4xf32>,
    return
  }
}

</mosaic_0001>

<llo_original>
// kernel: tpu_custom_call.1
$region0: #{tpu_custom_call.1}
  #allocation0 [shape = 'u32[]', space=smem, size = 0x4, offset = 0x4, fixed_abs, tag = 'smem constant byte address 0x4 - core index']
  #allocation1 [shape = 'u32[144,128]{1,0:T(1,128)}', space=vmem, size = 0x12000, scoped, tag = 'internal scratch']
  %s0 = inlined_call_operand.vmem [shape: s32[32,1], index: 0, kind: input, shape index: {}]
  %s1 = inlined_call_operand.vmem [shape: f32[50,32], index: 1, kind: input, shape index: {}]
  %s2 = inlined_call_operand.vmem [shape: f32[32,72], index: 2, kind: input, shape index: {}]
  %s3 = inlined_call_operand.vmem [shape: f32[1,24], index: 3, kind: input, shape index: {}]
  %s4 = inlined_call_operand.vmem [shape: f32[24,4], index: 4, kind: input, shape index: {}]
  %s5 = inlined_call_operand.vmem [shape: f32[1,4], index: 5, kind: input, shape index: {}]
  %s6 = inlined_call_operand.hbm [shape: f32[2,4], index: 6, kind: output, shape index: {}]
  %s7 = sld [smem:[#allocation0]]
  $region34: #{tpu_custom_call.1} parent=0
    _
  %s9 = ssub.s32 1, %s7
  %s10 = scalar_select 0, %s9, %s7
  $region1: #{tpu_custom_call.1} parent=0
    #allocation2 [shape = 'u8[1024]{0}', space=vmem, size = 0x400, scoped, tag = 'output window, operand 0, single buffered']
    #allocation3 [shape = 's32[1]{0}', space=sflag, size = 0x4, scoped, tag = 'scoped memory for tpu_custom_call.1']
    %11 = vsyncpa [#allocation3], 0
    // Predicated region
    $region2: #{tpu_custom_call.1} parent=1 // pred_check
      _
    $region3: #{tpu_custom_call.1} parent=1 // pred_check_branch
      %13 = sbr.rel (0) target = $region5
    $region4: #{tpu_custom_call.1} parent=1 // pred_region
      _
    $region5: #{tpu_custom_call.1} parent=1 // pred_fallthru
      _
    // Predicated region
    $region6: #{tpu_custom_call.1} parent=1 // pred_check
      _
    $region7: #{tpu_custom_call.1} parent=1 // pred_check_branch
      %15 = sbr.rel (0) target = $region9
    $region8: #{tpu_custom_call.1} parent=1 // pred_region
      _
    $region9: #{tpu_custom_call.1} parent=1 // pred_fallthru
      _
    // Predicated region
    $region10: #{tpu_custom_call.1} parent=1 // pred_check
      _
    $region11: #{tpu_custom_call.1} parent=1 // pred_check_branch
      %17 = sbr.rel (0) target = $region13
    $region12: #{tpu_custom_call.1} parent=1 // pred_region
      _
    $region13: #{tpu_custom_call.1} parent=1 // pred_fallthru
      _
    // Predicated region
    $region14: #{tpu_custom_call.1} parent=1 // pred_check
      _
    $region15: #{tpu_custom_call.1} parent=1 // pred_check_branch
      %19 = sbr.rel (0) target = $region17
    $region16: #{tpu_custom_call.1} parent=1 // pred_region
      _
    $region17: #{tpu_custom_call.1} parent=1 // pred_fallthru
      _
    // Predicated region
    $region18: #{tpu_custom_call.1} parent=1 // pred_check
      _
    $region19: #{tpu_custom_call.1} parent=1 // pred_check_branch
      %21 = sbr.rel (0) target = $region21
    $region20: #{tpu_custom_call.1} parent=1 // pred_region
      _
    $region21: #{tpu_custom_call.1} parent=1 // pred_fallthru
      _
    // Predicated region
    $region22: #{tpu_custom_call.1} parent=1 // pred_check
      _
    $region23: #{tpu_custom_call.1} parent=1 // pred_check_branch
      %23 = sbr.rel (0) target = $region25
    $region24: #{tpu_custom_call.1} parent=1 // pred_region
      _
    $region25: #{tpu_custom_call.1} parent=1 // pred_fallthru
      _
    %v24 = vld [vmem:[%s0] sm:$0xff]
    %v25 = vld [vmem:[%s0 + $0x8] sm:$0xff]
    %v26 = vld [vmem:[%s0 + $0x10] sm:$0xff]
    %v27 = vld [vmem:[%s0 + $0x18] sm:$0xff]
    %v28 = vlaneseq
    %v29 = vand.u32 %v28, 127
    %30 = vset.pattern.permute.xlu0 0
    %31 = vperm.xlu0 %30, %v24
    %v32 = vpop.permute.xlu0 %31
    %33 = vset.pattern.permute.xlu0 0
    %34 = vperm.xlu0 %33, %v25
    %v35 = vpop.permute.xlu0 %34
    %36 = vset.pattern.permute.xlu0 0
    %37 = vperm.xlu0 %36, %v26
    %v38 = vpop.permute.xlu0 %37
    %39 = vset.pattern.permute.xlu0 0
    %40 = vperm.xlu0 %39, %v27
    %v41 = vpop.permute.xlu0 %40
    %vm42 = vcmp.eq.s32.totalorder %v29, %v32
    %vm43 = vcmp.eq.s32.totalorder %v29, %v35
    %vm44 = vcmp.eq.s32.totalorder %v29, %v38
    %vm45 = vcmp.eq.s32.totalorder %v29, %v41
    %v46 = vsel %vm42, 1, 0
    %v47 = vsel %vm43, 1, 0
    %v48 = vsel %vm44, 1, 0
    %v49 = vsel %vm45, 1, 0
    %v50 = vcvt.s32.f32 %v46
    %v51 = vcvt.s32.f32 %v47
    %v52 = vcvt.s32.f32 %v48
    %v53 = vcvt.s32.f32 %v49
    %v54 = vld [vmem:[%s1] sm:$0xff]
    %v55 = vld [vmem:[%s1 + $0x8] sm:$0xff]
    %v56 = vld [vmem:[%s1 + $0x10] sm:$0xff]
    %v57 = vld [vmem:[%s1 + $0x18] sm:$0xff]
    %v58 = vld [vmem:[%s1 + $0x20] sm:$0xff]
    %v59 = vld [vmem:[%s1 + $0x28] sm:$0xff]
    %v60 = vld [vmem:[%s1 + $0x30] sm:$0x3]
    %vm61 = vcmask 408576
    %v63 = vsel %vm61, %v50, 0
    %v66 = vsel %vm61, %v51, 0
    %v69 = vsel %vm61, %v52, 0
    %v72 = vsel %vm61, %v53, 0
    %vm74 = vcmask 1041408
    %v76 = vsel %vm74, %v60, 0
    %78 = vmatprep.subr.mxu0 0.0
    %79 = vmatpush1.msra.mxu0 0.0
    %80 = vmatprep.subr.mxu0 0.0
    %81 = vmatpush1.msra.mxu0 0.0
    %82 = vmatprep.subr.mxu0 0.0
    %83 = vmatpush1.msra.mxu0 0.0
    %84 = vmatprep.subr.mxu0 0.0
    %85 = vmatpush1.msra.mxu0 0.0
    %86 = vmatprep.subr.mxu0 0.0
    %87 = vmatpush1.msra.mxu0 0.0
    %88 = vmatprep.subr.mxu0 0.0
    %89 = vmatpush1.msra.mxu0 0.0
    %90 = vmatprep.subr.mxu0 0.0
    %91 = vmatpush1.msra.mxu0 0.0
    %92 = vmatprep.subr.mxu0 0.0
    %93 = vmatpush1.msra.mxu0 0.0
    %94 = vmatprep.subr.mxu0 0.0
    %95 = vmatpush1.msra.mxu0 0.0
    %96 = vmatprep.subr.mxu0 0.0
    %97 = vmatpush1.msra.mxu0 %v76
    %98 = vmatprep.subr.mxu0 0.0
    %99 = vmatpush1.msra.mxu0 %v59
    %100 = vmatprep.subr.mxu0 0.0
    %101 = vmatpush1.msra.mxu0 %v58
    %102 = vmatprep.subr.mxu0 0.0
    %103 = vmatpush1.msra.mxu0 %v57
    %104 = vmatprep.subr.mxu0 0.0
    %105 = vmatpush1.msra.mxu0 %v56
    %106 = vmatprep.subr.mxu0 0.0
    %107 = vmatpush1.msra.mxu0 %v55
    %108 = vmatprep.subr.mxu0 0.0
    %109 = vmatpush1.msra.mxu0 %v54
    %110 = vmatprep.subr.mxu0 0.0
    %111 = vmatpush2.msra.mxu0 0.0
    %112 = vmatprep.subr.mxu0 0.0
    %113 = vmatpush2.msra.mxu0 0.0
    %114 = vmatprep.subr.mxu0 0.0
    %115 = vmatpush2.msra.mxu0 0.0
    %116 = vmatprep.subr.mxu0 0.0
    %117 = vmatpush2.msra.mxu0 0.0
    %118 = vmatprep.subr.mxu0 0.0
    %119 = vmatpush2.msra.mxu0 0.0
    %120 = vmatprep.subr.mxu0 0.0
    %121 = vmatpush2.msra.mxu0 0.0
    %122 = vmatprep.subr.mxu0 0.0
    %123 = vmatpush2.msra.mxu0 0.0
    %124 = vmatprep.subr.mxu0 0.0
    %125 = vmatpush2.msra.mxu0 0.0
    %126 = vmatprep.subr.mxu0 0.0
    %127 = vmatpush2.msra.mxu0 0.0
    %128 = vmatprep.subr.mxu0 0.0
    %129 = vmatpush2.msra.mxu0 0.0
    %130 = vmatprep.subr.mxu0 0.0
    %131 = vmatpush2.msra.mxu0 0.0
    %132 = vmatprep.subr.mxu0 0.0
    %133 = vmatpush2.msra.mxu0 0.0
    %134 = vmatprep.subr.mxu0 0.0
    %135 = vmatpush2.msra.mxu0 0.0
    %136 = vmatprep.subr.mxu0 0.0
    %137 = vmatpush2.msra.mxu0 0.0
    %138 = vmatprep.subr.mxu0 0.0
    %139 = vmatpush2.msra.mxu0 0.0
    %140 = vmatprep.subr.mxu0 0.0
    %141 = vmatpush2.msra.mxu0 0.0
    %142 = vmatprep.mubr.f32.mxu0 0.0
    %143 = vmatmul.mubr.f32.gmra.mxu0 %v63
    %v144 = vpop.f32.mrf.mxu0
    %v145 = vadd.f32 0.0, %v144
    %v146 = vpop.f32.mrf.mxu0
    %147 = vmatprep.mubr.f32.mxu0 0.0
    %148 = vmatmul.mubr.f32.gmra.mxu0 %v66
    %v149 = vpop.f32.mrf.mxu0
    %v150 = vadd.f32 0.0, %v149
    %v151 = vpop.f32.mrf.mxu0
    %152 = vmatprep.mubr.f32.mxu0 0.0
    %153 = vmatmul.mubr.f32.gmra.mxu0 %v69
    %v154 = vpop.f32.mrf.mxu0
    %v155 = vadd.f32 0.0, %v154
    %v156 = vpop.f32.mrf.mxu0
    %157 = vmatprep.mubr.f32.mxu0 0.0
    %158 = vmatmul.mubr.f32.gmra.mxu0 %v72
    %v159 = vpop.f32.mrf.mxu0
    %v160 = vadd.f32 0.0, %v159
    %v161 = vpop.f32.mrf.mxu0
    %162 = vdwg.mxu0
    %v163 = vld [vmem:[%s2] sm:$0xff]
    %v164 = vld [vmem:[%s2 + $0x8] sm:$0xff]
    %v165 = vld [vmem:[%s2 + $0x10] sm:$0xff]
    %v166 = vld [vmem:[%s2 + $0x18] sm:$0xff]
    %vm167 = vcmask 261120
    %v169 = vsel %vm167, %v145, 0
    %v172 = vsel %vm167, %v150, 0
    %v175 = vsel %vm167, %v155, 0
    %v178 = vsel %vm167, %v160, 0
    %180 = vmatprep.subr.mxu0 0.0
    %181 = vmatpush1.msra.mxu0 0.0
    %182 = vmatprep.subr.mxu0 0.0
    %183 = vmatpush1.msra.mxu0 0.0
    %184 = vmatprep.subr.mxu0 0.0
    %185 = vmatpush1.msra.mxu0 0.0
    %186 = vmatprep.subr.mxu0 0.0
    %187 = vmatpush1.msra.mxu0 0.0
    %188 = vmatprep.subr.mxu0 0.0
    %189 = vmatpush1.msra.mxu0 0.0
    %190 = vmatprep.subr.mxu0 0.0
    %191 = vmatpush1.msra.mxu0 0.0
    %192 = vmatprep.subr.mxu0 0.0
    %193 = vmatpush1.msra.mxu0 0.0
    %194 = vmatprep.subr.mxu0 0.0
    %195 = vmatpush1.msra.mxu0 0.0
    %196 = vmatprep.subr.mxu0 0.0
    %197 = vmatpush1.msra.mxu0 0.0
    %198 = vmatprep.subr.mxu0 0.0
    %199 = vmatpush1.msra.mxu0 0.0
    %200 = vmatprep.subr.mxu0 0.0
    %201 = vmatpush1.msra.mxu0 0.0
    %202 = vmatprep.subr.mxu0 0.0
    %203 = vmatpush1.msra.mxu0 0.0
    %204 = vmatprep.subr.mxu0 0.0
    %205 = vmatpush1.msra.mxu0 %v166
    %206 = vmatprep.subr.mxu0 0.0
    %207 = vmatpush1.msra.mxu0 %v165
    %208 = vmatprep.subr.mxu0 0.0
    %209 = vmatpush1.msra.mxu0 %v164
    %210 = vmatprep.subr.mxu0 0.0
    %211 = vmatpush1.msra.mxu0 %v163
    %212 = vmatprep.subr.mxu0 0.0
    %213 = vmatpush2.msra.mxu0 0.0
    %214 = vmatprep.subr.mxu0 0.0
    %215 = vmatpush2.msra.mxu0 0.0
    %216 = vmatprep.subr.mxu0 0.0
    %217 = vmatpush2.msra.mxu0 0.0
    %218 = vmatprep.subr.mxu0 0.0
    %219 = vmatpush2.msra.mxu0 0.0
    %220 = vmatprep.subr.mxu0 0.0
    %221 = vmatpush2.msra.mxu0 0.0
    %222 = vmatprep.subr.mxu0 0.0
    %223 = vmatpush2.msra.mxu0 0.0
    %224 = vmatprep.subr.mxu0 0.0
    %225 = vmatpush2.msra.mxu0 0.0
    %226 = vmatprep.subr.mxu0 0.0
    %227 = vmatpush2.msra.mxu0 0.0
    %228 = vmatprep.subr.mxu0 0.0
    %229 = vmatpush2.msra.mxu0 0.0
    %230 = vmatprep.subr.mxu0 0.0
    %231 = vmatpush2.msra.mxu0 0.0
    %232 = vmatprep.subr.mxu0 0.0
    %233 = vmatpush2.msra.mxu0 0.0
    %234 = vmatprep.subr.mxu0 0.0
    %235 = vmatpush2.msra.mxu0 0.0
    %236 = vmatprep.subr.mxu0 0.0
    %237 = vmatpush2.msra.mxu0 0.0
    %238 = vmatprep.subr.mxu0 0.0
    %239 = vmatpush2.msra.mxu0 0.0
    %240 = vmatprep.subr.mxu0 0.0
    %241 = vmatpush2.msra.mxu0 0.0
    %242 = vmatprep.subr.mxu0 0.0
    %243 = vmatpush2.msra.mxu0 0.0
    %244 = vmatprep.mubr.f32.mxu0 0.0
    %245 = vmatmul.mubr.f32.gmra.mxu0 %v169
    %v246 = vpop.f32.mrf.mxu0
    %v247 = vadd.f32 0.0, %v246
    %v248 = vpop.f32.mrf.mxu0
    %249 = vmatprep.mubr.f32.mxu0 0.0
    %250 = vmatmul.mubr.f32.gmra.mxu0 %v172
    %v251 = vpop.f32.mrf.mxu0
    %v252 = vadd.f32 0.0, %v251
    %v253 = vpop.f32.mrf.mxu0
    %254 = vmatprep.mubr.f32.mxu0 0.0
    %255 = vmatmul.mubr.f32.gmra.mxu0 %v175
    %v256 = vpop.f32.mrf.mxu0
    %v257 = vadd.f32 0.0, %v256
    %v258 = vpop.f32.mrf.mxu0
    %259 = vmatprep.mubr.f32.mxu0 0.0
    %260 = vmatmul.mubr.f32.gmra.mxu0 %v178
    %v261 = vpop.f32.mrf.mxu0
    %v262 = vadd.f32 0.0, %v261
    %v263 = vpop.f32.mrf.mxu0
    %264 = vdwg.mxu0
    %v265 = vld [vmem:[%s5] sm:$0x1]
    %v267 = vlaneseq
    %v268 = vshrl.u32 %v267, 7
    %v269 = vsub.s32 0, %v268
    %v270 = vrot.slane %v265, %v269
    %v272 = vadd.f32 %v247, 0.0
    %v273 = vadd.f32 %v252, 0.0
    %v274 = vadd.f32 %v257, 0.0
    %v275 = vadd.f32 %v262, 0.0
    %vm280 = vcmask 1046528
    %v281 = vrot.slane %v247, 1
    %v282 = vrot.slane %v252, 1
    %v283 = vsel %vm280, %v281, %v282
    %v284 = vrot.slane %v257, 1
    %v285 = vrot.slane %v262, 1
    %v286 = vsel %vm280, %v284, %v285
    %287 = vrot.lane.b32.xlu0 %v283, 120
    %v288 = vpop.permute.xlu0 %287
    %289 = vrot.lane.b32.xlu0 %v282, 120
    %v290 = vpop.permute.xlu0 %289
    %291 = vrot.lane.b32.xlu0 %v286, 120
    %v292 = vpop.permute.xlu0 %291
    %293 = vrot.lane.b32.xlu0 %v285, 120
    %v294 = vpop.permute.xlu0 %293
    %v299 = vadd.f32 %v272, %v288
    %v300 = vadd.f32 %v273, %v290
    %v301 = vadd.f32 %v274, %v292
    %v302 = vadd.f32 %v275, %v294
    %v303 = vld [vmem:[%s3] sm:$0x1]
    %v305 = vlaneseq
    %v306 = vshrl.u32 %v305, 7
    %v307 = vsub.s32 0, %v306
    %v308 = vrot.slane %v303, %v307
    %v310 = vadd.f32 %v299, %v308
    %v311 = vadd.f32 %v300, %v308
    %v312 = vadd.f32 %v301, %v308
    %v313 = vadd.f32 %v302, %v308
    %v314 = vmax.f32 %v310, 0.0
    %v315 = vmax.f32 %v311, 0.0
    %v316 = vmax.f32 %v312, 0.0
    %v317 = vmax.f32 %v313, 0.0
    %vm318 = vcmask 64512
    %v319 = vsel %vm318, %v314, -inf
    %vm320 = vcmask 63488
    %v321 = vsel %vm320, %v315, -inf
    %v322 = vmax.f32 %v319, %v321
    %v323 = vrot.slane %v322, 4
    %v324 = vmax.f32 %v322, %v323
    %v325 = vrot.slane %v324, 2
    %v326 = vmax.f32 %v324, %v325
    %v327 = vrot.slane %v326, 1
    %v328 = vmax.f32 %v326, %v327
    %v329 = vsel %vm318, %v316, -inf
    %v330 = vsel %vm320, %v317, -inf
    %v331 = vmax.f32 %v329, %v330
    %v332 = vrot.slane %v331, 4
    %v333 = vmax.f32 %v331, %v332
    %v334 = vrot.slane %v333, 2
    %v335 = vmax.f32 %v333, %v334
    %v336 = vrot.slane %v335, 1
    %v337 = vmax.f32 %v335, %v336
    %v338 = vld [vmem:[%s4] sm:$0xff]
    %vm341 = vcmask 1041409
    %v342 = vsel %vm341, %v337, %v328
    %v343 = vsel %vm318, %v342, 0
    %345 = vmatprep.subr.mxu0 0.0
    %346 = vmatpush1.msra.mxu0 0.0
    %347 = vmatprep.subr.mxu0 0.0
    %348 = vmatpush1.msra.mxu0 0.0
    %349 = vmatprep.subr.mxu0 0.0
    %350 = vmatpush1.msra.mxu0 0.0
    %351 = vmatprep.subr.mxu0 0.0
    %352 = vmatpush1.msra.mxu0 0.0
    %353 = vmatprep.subr.mxu0 0.0
    %354 = vmatpush1.msra.mxu0 0.0
    %355 = vmatprep.subr.mxu0 0.0
    %356 = vmatpush1.msra.mxu0 0.0
    %357 = vmatprep.subr.mxu0 0.0
    %358 = vmatpush1.msra.mxu0 0.0
    %359 = vmatprep.subr.mxu0 0.0
    %360 = vmatpush1.msra.mxu0 0.0
    %361 = vmatprep.subr.mxu0 0.0
    %362 = vmatpush1.msra.mxu0 0.0
    %363 = vmatprep.subr.mxu0 0.0
    %364 = vmatpush1.msra.mxu0 0.0
    %365 = vmatprep.subr.mxu0 0.0
    %366 = vmatpush1.msra.mxu0 0.0
    %367 = vmatprep.subr.mxu0 0.0
    %368 = vmatpush1.msra.mxu0 0.0
    %369 = vmatprep.subr.mxu0 0.0
    %370 = vmatpush1.msra.mxu0 0.0
    %371 = vmatprep.subr.mxu0 0.0
    %372 = vmatpush1.msra.mxu0 0.0
    %373 = vmatprep.subr.mxu0 0.0
    %374 = vmatpush1.msra.mxu0 0.0
    %375 = vmatprep.subr.mxu0 0.0
    %376 = vmatpush1.msra.mxu0 %v338
    %377 = vmatprep.subr.mxu0 0.0
    %378 = vmatpush2.msra.mxu0 0.0
    %379 = vmatprep.subr.mxu0 0.0
    %380 = vmatpush2.msra.mxu0 0.0
    %381 = vmatprep.subr.mxu0 0.0
    %382 = vmatpush2.msra.mxu0 0.0
    %383 = vmatprep.subr.mxu0 0.0
    %384 = vmatpush2.msra.mxu0 0.0
    %385 = vmatprep.subr.mxu0 0.0
    %386 = vmatpush2.msra.mxu0 0.0
    %387 = vmatprep.subr.mxu0 0.0
    %388 = vmatpush2.msra.mxu0 0.0
    %389 = vmatprep.subr.mxu0 0.0
    %390 = vmatpush2.msra.mxu0 0.0
    %391 = vmatprep.subr.mxu0 0.0
    %392 = vmatpush2.msra.mxu0 0.0
    %393 = vmatprep.subr.mxu0 0.0
    %394 = vmatpush2.msra.mxu0 0.0
    %395 = vmatprep.subr.mxu0 0.0
    %396 = vmatpush2.msra.mxu0 0.0
    %397 = vmatprep.subr.mxu0 0.0
    %398 = vmatpush2.msra.mxu0 0.0
    %399 = vmatprep.subr.mxu0 0.0
    %400 = vmatpush2.msra.mxu0 0.0
    %401 = vmatprep.subr.mxu0 0.0
    %402 = vmatpush2.msra.mxu0 0.0
    %403 = vmatprep.subr.mxu0 0.0
    %404 = vmatpush2.msra.mxu0 0.0
    %405 = vmatprep.subr.mxu0 0.0
    %406 = vmatpush2.msra.mxu0 0.0
    %407 = vmatprep.subr.mxu0 0.0
    %408 = vmatpush2.msra.mxu0 0.0
    %409 = vmatprep.mubr.f32.mxu0 0.0
    %410 = vmatmul.mubr.f32.gmra.mxu0 %v343
    %v411 = vpop.f32.mrf.mxu0
    %v412 = vadd.f32 0.0, %v411
    %v413 = vpop.f32.mrf.mxu0
    %414 = vdwg.mxu0
    %v415 = vadd.f32 %v270, %v412
    %vm416 = vcmask 1045504
    %v417 = vrot.slane %v247, 2
    %v418 = vrot.slane %v252, 2
    %v419 = vsel %vm416, %v417, %v418
    %v420 = vrot.slane %v257, 2
    %v421 = vrot.slane %v262, 2
    %v422 = vsel %vm416, %v420, %v421
    %423 = vrot.lane.b32.xlu0 %v419, 112
    %v424 = vpop.permute.xlu0 %423
    %425 = vrot.lane.b32.xlu0 %v418, 112
    %v426 = vpop.permute.xlu0 %425
    %427 = vrot.lane.b32.xlu0 %v422, 112
    %v428 = vpop.permute.xlu0 %427
    %429 = vrot.lane.b32.xlu0 %v421, 112
    %v430 = vpop.permute.xlu0 %429
    %v435 = vadd.f32 %v299, %v424
    %v436 = vadd.f32 %v300, %v426
    %v437 = vadd.f32 %v301, %v428
    %v438 = vadd.f32 %v302, %v430
    %439 = vrot.lane.b32.xlu0 %v308, 8
    %v440 = vpop.permute.xlu0 %439
    %v442 = vadd.f32 %v435, %v440
    %v443 = vadd.f32 %v436, %v440
    %v444 = vadd.f32 %v437, %v440
    %v445 = vadd.f32 %v438, %v440
    %v446 = vmax.f32 %v442, 0.0
    %v447 = vmax.f32 %v443, 0.0
    %v448 = vmax.f32 %v444, 0.0
    %v449 = vmax.f32 %v445, 0.0
    %vm450 = vcmask 195712
    %v451 = vsel %vm450, %v446, -inf
    %vm452 = vcmask 193664
    %v453 = vsel %vm452, %v447, -inf
    %v454 = vmax.f32 %v451, %v453
    %v455 = vrot.slane %v454, 4
    %v456 = vmax.f32 %v454, %v455
    %v457 = vrot.slane %v456, 2
    %v458 = vmax.f32 %v456, %v457
    %v459 = vrot.slane %v458, 1
    %v460 = vmax.f32 %v458, %v459
    %v461 = vsel %vm450, %v448, -inf
    %v462 = vsel %vm452, %v449, -inf
    %v463 = vmax.f32 %v461, %v462
    %v464 = vrot.slane %v463, 4
    %v465 = vmax.f32 %v463, %v464
    %v466 = vrot.slane %v465, 2
    %v467 = vmax.f32 %v465, %v466
    %v468 = vrot.slane %v467, 1
    %v469 = vmax.f32 %v467, %v468
    %v470 = vld [vmem:[%s4 + $0x8] sm:$0xff]
    %v473 = vsel %vm341, %v469, %v460
    %474 = vrot.lane.b32.xlu0 %v473, 112
    %v475 = vpop.permute.xlu0 %474
    %v476 = vsel %vm318, %v475, 0
    %478 = vmatprep.subr.mxu0 0.0
    %479 = vmatpush1.msra.mxu0 0.0
    %480 = vmatprep.subr.mxu0 0.0
    %481 = vmatpush1.msra.mxu0 0.0
    %482 = vmatprep.subr.mxu0 0.0
    %483 = vmatpush1.msra.mxu0 0.0
    %484 = vmatprep.subr.mxu0 0.0
    %485 = vmatpush1.msra.mxu0 0.0
    %486 = vmatprep.subr.mxu0 0.0
    %487 = vmatpush1.msra.mxu0 0.0
    %488 = vmatprep.subr.mxu0 0.0
    %489 = vmatpush1.msra.mxu0 0.0
    %490 = vmatprep.subr.mxu0 0.0
    %491 = vmatpush1.msra.mxu0 0.0
    %492 = vmatprep.subr.mxu0 0.0
    %493 = vmatpush1.msra.mxu0 0.0
    %494 = vmatprep.subr.mxu0 0.0
    %495 = vmatpush1.msra.mxu0 0.0
    %496 = vmatprep.subr.mxu0 0.0
    %497 = vmatpush1.msra.mxu0 0.0
    %498 = vmatprep.subr.mxu0 0.0
    %499 = vmatpush1.msra.mxu0 0.0
    %500 = vmatprep.subr.mxu0 0.0
    %501 = vmatpush1.msra.mxu0 0.0
    %502 = vmatprep.subr.mxu0 0.0
    %503 = vmatpush1.msra.mxu0 0.0
    %504 = vmatprep.subr.mxu0 0.0
    %505 = vmatpush1.msra.mxu0 0.0
    %506 = vmatprep.subr.mxu0 0.0
    %507 = vmatpush1.msra.mxu0 0.0
    %508 = vmatprep.subr.mxu0 0.0
    %509 = vmatpush1.msra.mxu0 %v470
    %510 = vmatprep.subr.mxu0 0.0
    %511 = vmatpush2.msra.mxu0 0.0
    %512 = vmatprep.subr.mxu0 0.0
    %513 = vmatpush2.msra.mxu0 0.0
    %514 = vmatprep.subr.mxu0 0.0
    %515 = vmatpush2.msra.mxu0 0.0
    %516 = vmatprep.subr.mxu0 0.0
    %517 = vmatpush2.msra.mxu0 0.0
    %518 = vmatprep.subr.mxu0 0.0
    %519 = vmatpush2.msra.mxu0 0.0
    %520 = vmatprep.subr.mxu0 0.0
    %521 = vmatpush2.msra.mxu0 0.0
    %522 = vmatprep.subr.mxu0 0.0
    %523 = vmatpush2.msra.mxu0 0.0
    %524 = vmatprep.subr.mxu0 0.0
    %525 = vmatpush2.msra.mxu0 0.0
    %526 = vmatprep.subr.mxu0 0.0
    %527 = vmatpush2.msra.mxu0 0.0
    %528 = vmatprep.subr.mxu0 0.0
    %529 = vmatpush2.msra.mxu0 0.0
    %530 = vmatprep.subr.mxu0 0.0
    %531 = vmatpush2.msra.mxu0 0.0
    %532 = vmatprep.subr.mxu0 0.0
    %533 = vmatpush2.msra.mxu0 0.0
    %534 = vmatprep.subr.mxu0 0.0
    %535 = vmatpush2.msra.mxu0 0.0
    %536 = vmatprep.subr.mxu0 0.0
    %537 = vmatpush2.msra.mxu0 0.0
    %538 = vmatprep.subr.mxu0 0.0
    %539 = vmatpush2.msra.mxu0 0.0
    %540 = vmatprep.subr.mxu0 0.0
    %541 = vmatpush2.msra.mxu0 0.0
    %542 = vmatprep.mubr.f32.mxu0 0.0
    %543 = vmatmul.mubr.f32.gmra.mxu0 %v476
    %v544 = vpop.f32.mrf.mxu0
    %v545 = vadd.f32 0.0, %v544
    %v546 = vpop.f32.mrf.mxu0
    %547 = vdwg.mxu0
    %v548 = vadd.f32 %v415, %v545
    %vm549 = vcmask 1044480
    %v550 = vrot.slane %v247, 3
    %v551 = vrot.slane %v252, 3
    %v552 = vsel %vm549, %v550, %v551
    %v553 = vrot.slane %v257, 3
    %v554 = vrot.slane %v262, 3
    %v555 = vsel %vm549, %v553, %v554
    %556 = vrot.lane.b32.xlu0 %v552, 104
    %v557 = vpop.permute.xlu0 %556
    %558 = vrot.lane.b32.xlu0 %v551, 104
    %v559 = vpop.permute.xlu0 %558
    %560 = vrot.lane.b32.xlu0 %v555, 104
    %v561 = vpop.permute.xlu0 %560
    %562 = vrot.lane.b32.xlu0 %v554, 104
    %v563 = vpop.permute.xlu0 %562
    %v568 = vadd.f32 %v435, %v557
    %v569 = vadd.f32 %v436, %v559
    %v570 = vadd.f32 %v437, %v561
    %v571 = vadd.f32 %v438, %v563
    %572 = vrot.lane.b32.xlu0 %v308, 24
    %v573 = vpop.permute.xlu0 %572
    %v575 = vadd.f32 %v568, %v573
    %v576 = vadd.f32 %v569, %v573
    %v577 = vadd.f32 %v570, %v573
    %v578 = vadd.f32 %v571, %v573
    %v579 = vmax.f32 %v575, 0.0
    %v580 = vmax.f32 %v576, 0.0
    %v581 = vmax.f32 %v577, 0.0
    %v582 = vmax.f32 %v578, 0.0
    %vm583 = vcmask 392512
    %v584 = vsel %vm583, %v579, -inf
    %vm585 = vcmask 389440
    %v586 = vsel %vm585, %v580, -inf
    %v587 = vmax.f32 %v584, %v586
    %v588 = vrot.slane %v587, 4
    %v589 = vmax.f32 %v587, %v588
    %v590 = vrot.slane %v589, 2
    %v591 = vmax.f32 %v589, %v590
    %v592 = vrot.slane %v591, 1
    %v593 = vmax.f32 %v591, %v592
    %v594 = vsel %vm583, %v581, -inf
    %v595 = vsel %vm585, %v582, -inf
    %v596 = vmax.f32 %v594, %v595
    %v597 = vrot.slane %v596, 4
    %v598 = vmax.f32 %v596, %v597
    %v599 = vrot.slane %v598, 2
    %v600 = vmax.f32 %v598, %v599
    %v601 = vrot.slane %v600, 1
    %v602 = vmax.f32 %v600, %v601
    %v603 = vld [vmem:[%s4 + $0x10] sm:$0xff]
    %v606 = vsel %vm341, %v602, %v593
    %607 = vrot.lane.b32.xlu0 %v606, 88
    %v608 = vpop.permute.xlu0 %607
    %v609 = vsel %vm318, %v608, 0
    %611 = vmatprep.subr.mxu0 0.0
    %612 = vmatpush1.msra.mxu0 0.0
    %613 = vmatprep.subr.mxu0 0.0
    %614 = vmatpush1.msra.mxu0 0.0
    %615 = vmatprep.subr.mxu0 0.0
    %616 = vmatpush1.msra.mxu0 0.0
    %617 = vmatprep.subr.mxu0 0.0
    %618 = vmatpush1.msra.mxu0 0.0
    %619 = vmatprep.subr.mxu0 0.0
    %620 = vmatpush1.msra.mxu0 0.0
    %621 = vmatprep.subr.mxu0 0.0
    %622 = vmatpush1.msra.mxu0 0.0
    %623 = vmatprep.subr.mxu0 0.0
    %624 = vmatpush1.msra.mxu0 0.0
    %625 = vmatprep.subr.mxu0 0.0
    %626 = vmatpush1.msra.mxu0 0.0
    %627 = vmatprep.subr.mxu0 0.0
    %628 = vmatpush1.msra.mxu0 0.0
    %629 = vmatprep.subr.mxu0 0.0
    %630 = vmatpush1.msra.mxu0 0.0
    %631 = vmatprep.subr.mxu0 0.0
    %632 = vmatpush1.msra.mxu0 0.0
    %633 = vmatprep.subr.mxu0 0.0
    %634 = vmatpush1.msra.mxu0 0.0
    %635 = vmatprep.subr.mxu0 0.0
    %636 = vmatpush1.msra.mxu0 0.0
    %637 = vmatprep.subr.mxu0 0.0
    %638 = vmatpush1.msra.mxu0 0.0
    %639 = vmatprep.subr.mxu0 0.0
    %640 = vmatpush1.msra.mxu0 0.0
    %641 = vmatprep.subr.mxu0 0.0
    %642 = vmatpush1.msra.mxu0 %v603
    %643 = vmatprep.subr.mxu0 0.0
    %644 = vmatpush2.msra.mxu0 0.0
    %645 = vmatprep.subr.mxu0 0.0
    %646 = vmatpush2.msra.mxu0 0.0
    %647 = vmatprep.subr.mxu0 0.0
    %648 = vmatpush2.msra.mxu0 0.0
    %649 = vmatprep.subr.mxu0 0.0
    %650 = vmatpush2.msra.mxu0 0.0
    %651 = vmatprep.subr.mxu0 0.0
    %652 = vmatpush2.msra.mxu0 0.0
    %653 = vmatprep.subr.mxu0 0.0
    %654 = vmatpush2.msra.mxu0 0.0
    %655 = vmatprep.subr.mxu0 0.0
    %656 = vmatpush2.msra.mxu0 0.0
    %657 = vmatprep.subr.mxu0 0.0
    %658 = vmatpush2.msra.mxu0 0.0
    %659 = vmatprep.subr.mxu0 0.0
    %660 = vmatpush2.msra.mxu0 0.0
    %661 = vmatprep.subr.mxu0 0.0
    %662 = vmatpush2.msra.mxu0 0.0
    %663 = vmatprep.subr.mxu0 0.0
    %664 = vmatpush2.msra.mxu0 0.0
    %665 = vmatprep.subr.mxu0 0.0
    %666 = vmatpush2.msra.mxu0 0.0
    %667 = vmatprep.subr.mxu0 0.0
    %668 = vmatpush2.msra.mxu0 0.0
    %669 = vmatprep.subr.mxu0 0.0
    %670 = vmatpush2.msra.mxu0 0.0
    %671 = vmatprep.subr.mxu0 0.0
    %672 = vmatpush2.msra.mxu0 0.0
    %673 = vmatprep.subr.mxu0 0.0
    %674 = vmatpush2.msra.mxu0 0.0
    %675 = vmatprep.mubr.f32.mxu0 0.0
    %676 = vmatmul.mubr.f32.gmra.mxu0 %v609
    %v677 = vpop.f32.mrf.mxu0
    %v678 = vadd.f32 0.0, %v677
    %v679 = vpop.f32.mrf.mxu0
    %680 = vdwg.mxu0
    %v681 = vadd.f32 %v548, %v678
    %vm682 = vcmask 25600
    %v683 = vsel %vm682, %v681, -inf
    %684 = vmax.xlane.f32.xlu0 %v683
    %v685 = vpop.xlane.xlu0 %684
    %v686 = vsub.f32 %v681, %v685
    %v687 = vmul.f32 %v686, 1.442695
    %v688 = vpow.pop %v687
    %v689 = vsel %vm682, %v688, 0.0
    %690 = vadd.xlane.f32.xlu0 %v689
    %v691 = vpop.xlane.xlu0 %690
    %v692 = vrcp.pop %v691
    %v693 = vmul.f32 %v688, %v692
    %694 = vst.msk [vmem:[#allocation2] sm:$0x3] %vm682, %v693
    // Predicated region
    $region26: #{tpu_custom_call.1} parent=1 // pred_check
      _
    $region27: #{tpu_custom_call.1} parent=1 // pred_check_branch
      %696 = sbr.rel (0) target = $region29
    $region28: #{tpu_custom_call.1} parent=1 // pred_region
      %s698 = ssub.s32 32, 32
      %699 = vsyncadd [#allocation3], %s698
      %s701 = sshll.u32 [#allocation2], 4
      %s702 = int_to_ptr.vmem [resolvable:$true] %s701
      %704 = dma.vmem_to_hbm [thread:$0]  %s702, 32, %s6, [#allocation3]
    $region29: #{tpu_custom_call.1} parent=1 // pred_fallthru
      _
    // Predicated region
    $region30: #{tpu_custom_call.1} parent=1 // pred_check
      _
    $region31: #{tpu_custom_call.1} parent=1 // pred_check_branch
      %706 = sbr.rel (0) target = $region33
    $region32: #{tpu_custom_call.1} parent=1 // pred_region
      %707 = dma.done [#allocation3], 32
    $region33: #{tpu_custom_call.1} parent=1 // pred_fallthru
      _
    %708 = vsyncpa [#allocation3], 1

</llo_original>
